<compile_context>
chip_gen: v6e
topology: v6e:2x2x1
jax: 0.10.0
libtpu: 0.0.40
codegen_flags: <defaults>
</compile_context>

<pallas_src>
import jax
import jax.numpy as jnp
from jax.experimental import pallas as pl
from jax.experimental.pallas import tpu as pltpu


def _iou_rows_kernel(pred_ref, gt_ref, out_ref, inter_acc, sums_acc):
    """Per row-tile: accumulate intersect and sum(p)+sum(g) over HW tiles."""
    k = pl.program_id(1)

    @pl.when(k == 0)
    def _():
        inter_acc[...] = jnp.zeros_like(inter_acc)
        sums_acc[...] = jnp.zeros_like(sums_acc)

    p = pred_ref[...].astype(jnp.float32)  # (tm, tc)
    g = gt_ref[...].astype(jnp.float32)    # (tm, tc)
    inter_acc[...] += jnp.sum(p * g, axis=-1, keepdims=True)
    sums_acc[...] += jnp.sum(p + g, axis=-1, keepdims=True)

    @pl.when(k == pl.num_programs(1) - 1)
    def _():
        inter = inter_acc[...]
        union = sums_acc[...] - inter + 1e-6
        out_ref[...] = inter / union       # per-row IoU, (tm, 1)


def _vmem_budget():
    """(physical VMEM, scoped limit to request, per-block input budget)."""
    try:
        vmem_phys = int(pltpu.get_tpu_info().vmem_capacity_bytes)
    except Exception:
        vmem_phys = 64 * 1024 * 1024       # conservative (v7x per-core)
    vmem_limit = min((vmem_phys * 3) // 4, 96 * 1024 * 1024)
    per_block = vmem_limit // 8            # 2 inputs x 2 pipeline buffers, half scoped
    return vmem_phys, vmem_limit, per_block


def iou_pallas(pred, gt):
    """IoU over NC... tensors `pred`, `gt` using a Pallas TPU kernel."""
    if pred is None and gt is None:
        return jnp.float32(0.0)
    assert pred.shape == gt.shape
    n = int(pred.shape[0]) * int(pred.shape[1])
    hw = 1
    for d in pred.shape[2:]:
        hw *= int(d)

    # Pure reshape in the wrapper (no HBM copy, no dtype cast).
    p2 = pred.reshape(n, hw)
    g2 = gt.reshape(n, hw)
    itemsize = jnp.dtype(p2.dtype).itemsize

    vmem_phys, vmem_limit, per_block = _vmem_budget()
    max_elems = max(per_block // itemsize, 8 * 128)

    # Column tiling: keep the full HW extent per block unless even an 8-row
    # slab overflows the budget.  When splitting is required, the column tile
    # must be a lane-aligned divisor of HW so no column masking is needed;
    # zero-pad HW to a 128 multiple first if necessary (zeros are inert here).
    tc = hw
    if 8 * hw > max_elems:
        if hw % 128 != 0:
            hw_pad = ((hw + 127) // 128) * 128
            p2 = jnp.pad(p2, ((0, 0), (0, hw_pad - hw)))
            g2 = jnp.pad(g2, ((0, 0), (0, hw_pad - hw)))
            hw = hw_pad
        cand = max((max_elems // 8) // 128 * 128, 128)
        while cand > 128 and hw % cand != 0:
            cand -= 128
        tc = cand                           # hw % 128 == 0, so cand always divides hw

    # Row tiling: as many rows as fit the budget, multiple of 8, capped.
    tm = max(8, (min(max_elems // tc, 2048) // 8) * 8)
    if n < 8:
        tm = n                              # block == full row dim (legal)
    else:
        tm = min(tm, ((n + 7) // 8) * 8)

    grid_rows = pl.cdiv(n, tm)
    grid_cols = hw // tc if tc != hw else 1
    rows_out = grid_rows * tm

    # Make sure the chosen blocks actually fit under the scoped limit.
    footprint = 4 * tm * tc * itemsize + (4 << 20)
    vmem_limit = int(min(vmem_phys, max(vmem_limit, footprint)))

    per_row_iou = pl.pallas_call(
        _iou_rows_kernel,
        out_shape=jax.ShapeDtypeStruct((rows_out, 1), jnp.float32),
        grid_spec=pltpu.PrefetchScalarGridSpec(
            num_scalar_prefetch=0,
            grid=(grid_rows, grid_cols),
            in_specs=[
                pl.BlockSpec((tm, tc), lambda i, k: (i, k)),
                pl.BlockSpec((tm, tc), lambda i, k: (i, k)),
            ],
            out_specs=pl.BlockSpec((tm, 1), lambda i, k: (i, 0)),
            scratch_shapes=[
                pltpu.VMEM((tm, 1), jnp.float32),  # intersect accumulator
                pltpu.VMEM((tm, 1), jnp.float32),  # sum(p)+sum(g) accumulator
            ],
        ),
        compiler_params=pltpu.CompilerParams(
            dimension_semantics=("parallel", "arbitrary"),
            vmem_limit_bytes=vmem_limit,
        ),
    )(p2, g2)

    # Rows >= n belong to the partial tail block and hold garbage -> ignored.
    return jnp.sum(per_row_iou[:n, 0]) / n


def iou_reference(pred, gt):
    """Pure-JAX reference matching the PyTorch forward."""
    dims = tuple(range(2, pred.ndim))
    prod = pred * gt
    intersect = jnp.sum(prod, axis=dims)
    union = jnp.sum(pred + gt - prod, axis=dims) + 1e-6
    return jnp.sum(intersect / union) / intersect.size


if __name__ == "__main__":
    key = jax.random.PRNGKey(0)

    # Case 1: small NCHW binary masks (matches the module's typical use).
    k1, k2 = jax.random.split(key)
    B, C, H, W = 2, 4, 16, 16
    pred = (jax.random.uniform(k1, (B, C, H, W)) > 0.4).astype(jnp.float32)
    gt = (jax.random.uniform(k2, (B, C, H, W)) > 0.5).astype(jnp.float32)

    iou = iou_pallas(pred, gt)
    jax.block_until_ready(iou)
    ref = iou_reference(pred, gt)
    assert jnp.allclose(iou, ref, atol=1e-5, rtol=1e-5), (iou, ref)

    # Case 2: shapes exercising the partial tail row block (N % 8 != 0) and a
    # non-128-multiple spatial extent (full-HW column block).
    k3, k4 = jax.random.split(k1)
    B2, C2, H2, W2 = 3, 5, 20, 26
    pred2 = (jax.random.uniform(k3, (B2, C2, H2, W2)) > 0.4).astype(jnp.float32)
    gt2 = (jax.random.uniform(k4, (B2, C2, H2, W2)) > 0.5).astype(jnp.float32)

    iou2 = iou_pallas(pred2, gt2)
    jax.block_until_ready(iou2)
    ref2 = iou_reference(pred2, gt2)
    assert jnp.allclose(iou2, ref2, atol=1e-5, rtol=1e-5), (iou2, ref2)

    # TODO(synk): the PyTorch module raises PredictionException when
    # iou < threshold and KLOTHED_FIT_THROW_ON_ERROR is set; exceptions cannot
    # be raised from inside a TPU kernel, so only the scalar IoU is returned
    # and the threshold check is left to the caller.
    threshold = 0.5
    _below_threshold = bool(iou < threshold)

    print("KERNEL_OK")
</pallas_src>

<mosaic_0001>
module attributes {stable_mosaic.version = 11 : i64} {
  func.func @_iou_rows_kernel(%arg0: i32, %arg1: i32, %arg2: memref<8x256xf32, #tpu.memory_space<vmem>>, %arg3: memref<8x256xf32, #tpu.memory_space<vmem>>, %arg4: memref<8x1xf32, #tpu.memory_space<vmem>>, %arg5: memref<8x1xf32, #tpu.memory_space<vmem>>, %arg6: memref<8x1xf32, #tpu.memory_space<vmem>>) attributes {dimension_semantics = [#tpu.dimension_semantics<parallel>, #tpu.dimension_semantics<arbitrary>], iteration_bounds = array<i64: 1, 1>, scalar_prefetch = 0 : i64, scratch_operands = 2 : i64, tpu.core_type = #tpu.core_type<tc>, window_params = [{transform_indices = @transform_0, window_bounds = array<i64: 8, 256>}, {transform_indices = @transform_1, window_bounds = array<i64: 8, 256>}, {transform_indices = @transform_2, window_bounds = array<i64: 8, 1>}]} {
    %c0_i32 = arith.constant 0 : i32
    %0 = arith.cmpi eq, %arg1, %c0_i32 : i32
    %1 = arith.extui %0 : i1 to i32
    %c0_i32_0 = arith.constant 0 : i32
    %2 = arith.cmpi ne, %1, %c0_i32_0 : i32
    scf.if %2 {
      %cst_15 = arith.constant 0.000000e+00 : f32
      %20 = vector.broadcast %cst_15 : f32 to vector<8x1xf32>
      %c0_16 = arith.constant 0 : index
      %c0_17 = arith.constant 0 : index
      %21 = vector.load %arg5[%c0_16, %c0_17] : memref<8x1xf32, #tpu.memory_space<vmem>>, vector<8x1xf32>
      tpu.vector_store %arg5[%c0_16, %c0_17], %20 {strides = array<i32>} : memref<8x1xf32, #tpu.memory_space<vmem>>, vector<8x1xf32>,
      %cst_18 = arith.constant 0.000000e+00 : f32
      %22 = vector.broadcast %cst_18 : f32 to vector<8x1xf32>
      %c0_19 = arith.constant 0 : index
      %c0_20 = arith.constant 0 : index
      %23 = vector.load %arg6[%c0_19, %c0_20] : memref<8x1xf32, #tpu.memory_space<vmem>>, vector<8x1xf32>
      tpu.vector_store %arg6[%c0_19, %c0_20], %22 {strides = array<i32>} : memref<8x1xf32, #tpu.memory_space<vmem>>, vector<8x1xf32>,
    } else {
    }
    %c0 = arith.constant 0 : index
    %c0_1 = arith.constant 0 : index
    %3 = vector.load %arg2[%c0, %c0_1] : memref<8x256xf32, #tpu.memory_space<vmem>>, vector<8x256xf32>
    %c0_2 = arith.constant 0 : index
    %c0_3 = arith.constant 0 : index
    %4 = vector.load %arg3[%c0_2, %c0_3] : memref<8x256xf32, #tpu.memory_space<vmem>>, vector<8x256xf32>
    %c0_4 = arith.constant 0 : index
    %c0_5 = arith.constant 0 : index
    %5 = vector.load %arg5[%c0_4, %c0_5] : memref<8x1xf32, #tpu.memory_space<vmem>>, vector<8x1xf32>
    %6 = arith.mulf %3, %4 : vector<8x256xf32>
    %cst = arith.constant dense<0.000000e+00> : vector<8xf32>
    %7 = vector.multi_reduction <add>, %6, %cst [1] : vector<8x256xf32> to vector<8xf32>
    %8 = vector.shape_cast %7 : vector<8xf32> to vector<8x1xf32>
    %9 = arith.addf %5, %8 : vector<8x1xf32>
    %c0_6 = arith.constant 0 : index
    %c0_7 = arith.constant 0 : index
    %10 = vector.load %arg5[%c0_6, %c0_7] : memref<8x1xf32, #tpu.memory_space<vmem>>, vector<8x1xf32>
    tpu.vector_store %arg5[%c0_6, %c0_7], %9 {strides = array<i32>} : memref<8x1xf32, #tpu.memory_space<vmem>>, vector<8x1xf32>,
    %c0_8 = arith.constant 0 : index
    %c0_9 = arith.constant 0 : index
    %11 = vector.load %arg6[%c0_8, %c0_9] : memref<8x1xf32, #tpu.memory_space<vmem>>, vector<8x1xf32>
    %12 = arith.addf %3, %4 : vector<8x256xf32>
    %cst_10 = arith.constant dense<0.000000e+00> : vector<8xf32>
    %13 = vector.multi_reduction <add>, %12, %cst_10 [1] : vector<8x256xf32> to vector<8xf32>
    %14 = vector.shape_cast %13 : vector<8xf32> to vector<8x1xf32>
    %15 = arith.addf %11, %14 : vector<8x1xf32>
    %c0_11 = arith.constant 0 : index
    %c0_12 = arith.constant 0 : index
    %16 = vector.load %arg6[%c0_11, %c0_12] : memref<8x1xf32, #tpu.memory_space<vmem>>, vector<8x1xf32>
    tpu.vector_store %arg6[%c0_11, %c0_12], %15 {strides = array<i32>} : memref<8x1xf32, #tpu.memory_space<vmem>>, vector<8x1xf32>,
    %c0_i32_13 = arith.constant 0 : i32
    %17 = arith.cmpi eq, %arg1, %c0_i32_13 : i32
    %18 = arith.extui %17 : i1 to i32
    %c0_i32_14 = arith.constant 0 : i32
    %19 = arith.cmpi ne, %18, %c0_i32_14 : i32
    scf.if %19 {
      %c0_15 = arith.constant 0 : index
      %c0_16 = arith.constant 0 : index
      %20 = vector.load %arg5[%c0_15, %c0_16] : memref<8x1xf32, #tpu.memory_space<vmem>>, vector<8x1xf32>
      %c0_17 = arith.constant 0 : index
      %c0_18 = arith.constant 0 : index
      %21 = vector.load %arg6[%c0_17, %c0_18] : memref<8x1xf32, #tpu.memory_space<vmem>>, vector<8x1xf32>
      %22 = arith.subf %21, %20 : vector<8x1xf32>
      %cst_19 = arith.constant 9.99999997E-7 : f32
      %23 = vector.broadcast %cst_19 : f32 to vector<8x1xf32>
      %24 = arith.addf %22, %23 : vector<8x1xf32>
      %25 = arith.divf %20, %24 : vector<8x1xf32>
      %c0_20 = arith.constant 0 : index
      %c0_21 = arith.constant 0 : index
      %26 = vector.load %arg4[%c0_20, %c0_21] : memref<8x1xf32, #tpu.memory_space<vmem>>, vector<8x1xf32>
      tpu.vector_store %arg4[%c0_20, %c0_21], %25 {strides = array<i32>} : memref<8x1xf32, #tpu.memory_space<vmem>>, vector<8x1xf32>,
    } else {
    }
    return
  }
  func.func @transform_0(%arg0: i32, %arg1: i32) -> (i32, i32) {
    %c0_i32 = arith.constant 0 : i32
    return %arg0, %arg1 : i32, i32
  }
  func.func @transform_1(%arg0: i32, %arg1: i32) -> (i32, i32) {
    %c0_i32 = arith.constant 0 : i32
    return %arg0, %arg1 : i32, i32
  }
  func.func @transform_2(%arg0: i32, %arg1: i32) -> (i32, i32) {
    %c0_i32 = arith.constant 0 : i32
    %c0_i32_0 = arith.constant 0 : i32
    return %arg0, %c0_i32 : i32, i32
  }
}

</mosaic_0001>

<llo_original>
// kernel: tpu_custom_call.1
$region0: #{tpu_custom_call.1}
  #allocation0 [shape = 'u32[]', space=smem, size = 0x4, offset = 0x4, fixed_abs, tag = 'smem constant byte address 0x4 - core index']
  #allocation1 [shape = 'u32[144,128]{1,0:T(1,128)}', space=vmem, size = 0x12000, scoped, tag = 'internal scratch']
  #allocation2 [shape = 'f32[8,1]{1,0:T(8,128)}', space=vmem, size = 0x1000, scoped, tag = 'scratch operand']
  #allocation3 [shape = 'f32[8,1]{1,0:T(8,128)}', space=vmem, size = 0x1000, scoped, tag = 'scratch operand']
  %s0 = inlined_call_operand.hbm [shape: f32[8,256], index: 0, kind: input, shape index: {}]
  %s1 = inlined_call_operand.hbm [shape: f32[8,256], index: 1, kind: input, shape index: {}]
  %s2 = inlined_call_operand.vmem [shape: f32[8,1], index: 2, kind: output, shape index: {}]
  %s3 = sld [smem:[#allocation0]]
  $region34: #{tpu_custom_call.1} parent=0
    _
  %s5 = ssub.s32 1, %s3
  %s6 = scalar_select 0, %s5, %s3
  $region1: #{tpu_custom_call.1} parent=0
    #allocation4 [shape = 'u8[8192]{0}', space=vmem, size = 0x2000, scoped, tag = 'input window, operand 0, single buffered']
    #allocation5 [shape = 's32[1]{0}', space=sflag, size = 0x4, scoped, tag = 'scoped memory for tpu_custom_call.1']
    #allocation6 [shape = 'u8[8192]{0}', space=vmem, size = 0x2000, scoped, tag = 'input window, operand 1, single buffered']
    #allocation7 [shape = 's32[1]{0}', space=sflag, size = 0x4, scoped, tag = 'scoped memory for tpu_custom_call.1']
    %7 = vsyncpa [#allocation5], 0
    %8 = vsyncpa [#allocation7], 0
    // Predicated region
    $region2: #{tpu_custom_call.1} parent=1 // pred_check
      _
    $region3: #{tpu_custom_call.1} parent=1 // pred_check_branch
      %10 = sbr.rel (0) target = $region5
    $region4: #{tpu_custom_call.1} parent=1 // pred_region
      %s12 = ssub.s32 256, 256
      %13 = vsyncadd [#allocation5], %s12
      %s15 = sshll.u32 [#allocation4], 4
      %s16 = int_to_ptr.vmem [resolvable:$true] %s15
      %18 = dma.hbm_to_vmem [thread:$0]  %s0, 256, %s16, [#allocation5]
    $region5: #{tpu_custom_call.1} parent=1 // pred_fallthru
      _
    // Predicated region
    $region6: #{tpu_custom_call.1} parent=1 // pred_check
      _
    $region7: #{tpu_custom_call.1} parent=1 // pred_check_branch
      %20 = sbr.rel (0) target = $region9
    $region8: #{tpu_custom_call.1} parent=1 // pred_region
      %s22 = ssub.s32 256, 256
      %23 = vsyncadd [#allocation7], %s22
      %s25 = sshll.u32 [#allocation6], 4
      %s26 = int_to_ptr.vmem [resolvable:$true] %s25
      %28 = dma.hbm_to_vmem [thread:$0]  %s1, 256, %s26, [#allocation7]
    $region9: #{tpu_custom_call.1} parent=1 // pred_fallthru
      _
    // Predicated region
    $region10: #{tpu_custom_call.1} parent=1 // pred_check
      _
    $region11: #{tpu_custom_call.1} parent=1 // pred_check_branch
      %30 = sbr.rel (0) target = $region13
    $region12: #{tpu_custom_call.1} parent=1 // pred_region
      %31 = dma.done [#allocation5], 256
    $region13: #{tpu_custom_call.1} parent=1 // pred_fallthru
      _
    // Predicated region
    $region14: #{tpu_custom_call.1} parent=1 // pred_check
      _
    $region15: #{tpu_custom_call.1} parent=1 // pred_check_branch
      %33 = sbr.rel (0) target = $region17
    $region16: #{tpu_custom_call.1} parent=1 // pred_region
      %34 = dma.done [#allocation7], 256
    $region17: #{tpu_custom_call.1} parent=1 // pred_fallthru
      _
    %p35 = scmp.eq.s32.totalorder 0, 0
    // Predicated region
    $region18: #{tpu_custom_call.1} parent=1 // pred_check
      %p36 = pneg %p35
    $region19: #{tpu_custom_call.1} parent=1 // pred_check_branch
      %38 = sbr.rel (%p36) target = $region21
    $region20: #{tpu_custom_call.1} parent=1 // pred_region
      %vm39 = vcmask 7168
      %40 = vst.msk [vmem:[#allocation2] sm:$0xff] %vm39, 0.0
      %41 = vst.msk [vmem:[#allocation3] sm:$0xff] %vm39, 0.0
    $region21: #{tpu_custom_call.1} parent=1 // pred_fallthru
      _
    %v42 = vld [vmem:[#allocation4] sm:$0xff]
    %v43 = vld [vmem:[#allocation4 + $0x8] sm:$0xff]
    %v44 = vld [vmem:[#allocation6] sm:$0xff]
    %v45 = vld [vmem:[#allocation6 + $0x8] sm:$0xff]
    %v46 = vld [vmem:[#allocation2] sm:$0xff]
    %v47 = vmul.f32 %v42, %v44
    %v48 = vmul.f32 %v43, %v45
    %v49 = vadd.f32 %v47, %v48
    %50 = vadd.xlane.f32.xlu0 %v49
    %v51 = vpop.xlane.xlu0 %50
    %v52 = vadd.f32 %v46, %v51
    %vm53 = vcmask 7168
    %54 = vst.msk [vmem:[#allocation2] sm:$0xff] %vm53, %v52
    %v55 = vld [vmem:[#allocation3] sm:$0xff]
    %v56 = vadd.f32 %v42, %v44
    %v57 = vadd.f32 %v43, %v45
    %v58 = vadd.f32 %v56, %v57
    %59 = vadd.xlane.f32.xlu0 %v58
    %v60 = vpop.xlane.xlu0 %59
    %v61 = vadd.f32 %v55, %v60
    %62 = vst.msk [vmem:[#allocation3] sm:$0xff] %vm53, %v61
    // Predicated region
    $region22: #{tpu_custom_call.1} parent=1 // pred_check
      %p63 = pneg %p35
    $region23: #{tpu_custom_call.1} parent=1 // pred_check_branch
      %65 = sbr.rel (%p63) target = $region25
    $region24: #{tpu_custom_call.1} parent=1 // pred_region
      %v66 = vld [vmem:[#allocation2] sm:$0xff]
      %v67 = vld [vmem:[#allocation3] sm:$0xff]
      %v68 = vsub.f32 %v67, %v66
      %v69 = vadd.f32 %v68, 1e-06
      %v70 = vrcp.pop %v69
      %v71 = vmul.f32 %v66, %v70
      %72 = vst.msk [vmem:[%s2] sm:$0xff] %vm53, %v71
    $region25: #{tpu_custom_call.1} parent=1 // pred_fallthru
      _
    // Predicated region
    $region26: #{tpu_custom_call.1} parent=1 // pred_check
      _
    $region27: #{tpu_custom_call.1} parent=1 // pred_check_branch
      %74 = sbr.rel (0) target = $region29
    $region28: #{tpu_custom_call.1} parent=1 // pred_region
      _
    $region29: #{tpu_custom_call.1} parent=1 // pred_fallthru
      _
    // Predicated region
    $region30: #{tpu_custom_call.1} parent=1 // pred_check
      _
    $region31: #{tpu_custom_call.1} parent=1 // pred_check_branch
      %76 = sbr.rel (0) target = $region33
    $region32: #{tpu_custom_call.1} parent=1 // pred_region
      _
    $region33: #{tpu_custom_call.1} parent=1 // pred_fallthru
      _
    %77 = vsyncpa [#allocation5], 1
    %78 = vsyncpa [#allocation7], 1

</llo_original>
